<compile_context>
chip_gen: v6e
topology: v6e:2x2x1
jax: 0.10.0
libtpu: 0.0.40
codegen_flags: <defaults>
</compile_context>

<pallas_src>
import jax
import jax.numpy as jnp
from jax.experimental import pallas as pl
from jax.experimental.pallas import tpu as pltpu

HIDDEN = 768


def _round_up(x, m):
    return ((x + m - 1) // m) * m


def _choose_tile(M, tm):
    """Pick a 128-aligned row tile <= tm, keeping >= ~4 grid steps if M allows."""
    tm_eff = min(_round_up(tm, 128), _round_up(M, 128))
    while tm_eff > 128 and pl.cdiv(M, tm_eff) < 4:
        tm_eff = _round_up(tm_eff // 2, 128)
    return tm_eff


# ----------------------------------------------------------------------------
# Pallas kernel: fused S/E linear head + biaffine-edge scaling + masked
#                sigmoid predictions + fused (per-tile) weighted-BCE sums.
# ----------------------------------------------------------------------------
def _table_head_kernel(x_ref, w_ref, b_ref, side_ref, pred_ref, bce_ref):
    # (tm, K) @ (K, 2) on the MXU with f32 accumulation.  Only the tiny
    # (tm, 2) result is transposed (XLU, free slot vs the VALU) so that every
    # store below is a lane-dense, unmasked store.
    logits = jnp.dot(x_ref[...], w_ref[...], preferred_element_type=jnp.float32)
    logits = logits + b_ref[...]                          # (tm, 2) f32, bias first
    lg = jnp.transpose(logits)                            # (2, tm)

    side = side_ref[...]                                  # (4, tm) f32
    edge = side[0:2, :]                                   # rows: edge_S, edge_E
    labels = side[2:4, :]                                 # rows: lab_S, lab_E (may be -1)
    lg = lg * (1.0 + edge)                                # biaffine edge scaling

    # BCEWithLogitsLoss weight = (table_labels_S >= 0); the PyTorch reference
    # applies the S-label mask to BOTH the S and E heads (loss AND preds).
    weight = (side[2:3, :] >= 0.0).astype(jnp.float32)    # (1, tm)

    # Numerically stable BCE-with-logits: t*softplus(-x) + (1-t)*softplus(x).
    # Labels of -1 enter the formula but are zeroed by `weight`.
    sp_neg = jnp.logaddexp(-lg, 0.0)
    sp_pos = jnp.logaddexp(lg, 0.0)
    wbce = weight * (labels * sp_neg + (1.0 - labels) * sp_pos)   # (2, tm)

    pred_ref[...] = jax.nn.sigmoid(lg) * weight            # lane-dense (2, tm)

    # Fused reduction: one partial sum per tile (lane 0 of a (2, 128) block,
    # rest zero); the wrapper finishes the tiny final sum.
    part = jnp.sum(wbce, axis=1, keepdims=True)             # (2, 1)
    lane = jax.lax.broadcasted_iota(jnp.int32, bce_ref.shape, 1)
    bce_ref[...] = jnp.where(lane == 0, part, 0.0)


def table_head(table, edge_S, edge_E, labels_S, labels_E, w, b, *, tm=1024):
    B, L, _, K = table.shape
    M = B * L * L

    # Keep the table in its native dtype (bf16 upstream halves the dominant
    # HBM read; f32 also works).  Never up-cast here: that would add a full
    # extra HBM round trip in XLA before the kernel even starts.
    x = table.reshape(M, K)
    w = w.astype(x.dtype)                                  # (K, 2), tiny
    b = b.astype(jnp.float32).reshape(1, 2)

    tm_eff = _choose_tile(M, tm)
    grid = pl.cdiv(M, tm_eff)
    M_pad = grid * tm_eff

    # One packed, lane-dense side array: rows = [edge_S, edge_E, lab_S, lab_E].
    side = jnp.concatenate(
        [edge_S.reshape(1, M).astype(jnp.float32),
         edge_E.reshape(1, M).astype(jnp.float32),
         labels_S.reshape(1, M).astype(jnp.float32),
         labels_E.reshape(1, M).astype(jnp.float32)], axis=0)     # (4, M)

    if M_pad != M:
        # Pad rows: labels become -1 -> weight 0 -> zero loss / zero preds.
        x = jnp.pad(x, ((0, M_pad - M), (0, 0)))
        side = jnp.pad(side, ((0, 0), (0, M_pad - M)), constant_values=-1.0)

    # Generous-but-safe scoped-VMEM budget: the x tile double-buffered is the
    # dominant term; clamp to >= default (32 MiB) and <= v7x physical (64 MiB).
    tile_bytes = tm_eff * K * jnp.dtype(x.dtype).itemsize
    vmem_limit = int(min(64 << 20, max(32 << 20, 3 * tile_bytes)))

    preds, bce_part = pl.pallas_call(
        _table_head_kernel,
        out_shape=(
            jax.ShapeDtypeStruct((2, M_pad), jnp.float32),        # sigmoid preds (S; E)
            jax.ShapeDtypeStruct((2, 128 * grid), jnp.float32),   # per-tile BCE sums
        ),
        grid_spec=pltpu.PrefetchScalarGridSpec(
            num_scalar_prefetch=0,
            grid=(grid,),
            in_specs=[
                pl.BlockSpec((tm_eff, K), lambda i: (i, 0)),      # activation rows
                pl.BlockSpec((K, 2), lambda i: (0, 0)),           # fused S/E weights
                pl.BlockSpec((1, 2), lambda i: (0, 0)),           # fused S/E biases
                pl.BlockSpec((4, tm_eff), lambda i: (0, i)),      # packed edges+labels
            ],
            out_specs=[
                pl.BlockSpec((2, tm_eff), lambda i: (0, i)),
                pl.BlockSpec((2, 128), lambda i: (0, i)),
            ],
        ),
        compiler_params=pltpu.CompilerParams(
            dimension_semantics=("parallel",),
            vmem_limit_bytes=vmem_limit,
        ),
    )(x, w, b, side)

    S_pred = preds[0, :M].reshape(B, L, L)
    E_pred = preds[1, :M].reshape(B, L, L)
    # BCEWithLogitsLoss(reduction='mean') divides by the total element count M.
    loss_S = bce_part[0].sum() / M
    loss_E = bce_part[1].sum() / M
    return S_pred, E_pred, loss_S, loss_E


# ----------------------------------------------------------------------------
# Cross entropy with ignore_index = -1.  Plain jnp: at (B*T, C=6) a
# pallas_call is pure launch overhead (6/128 lanes used).
# TODO(synk): if production B*T grows large, move this to a row-tiled Pallas
#             kernel (block (rows, C), grid over rows).
# ----------------------------------------------------------------------------
def cross_entropy_ignore(pred_tags, golde_tags):
    C = pred_tags.shape[-1]
    logits = pred_tags.reshape(-1, C).astype(jnp.float32)
    labels = golde_tags.reshape(-1).astype(jnp.int32)
    m = jnp.max(logits, axis=-1, keepdims=True)
    lse = m[:, 0] + jnp.log(jnp.sum(jnp.exp(logits - m), axis=-1))
    tgt = jnp.take_along_axis(logits, jnp.maximum(labels, 0)[:, None], axis=-1)[:, 0]
    valid = labels >= 0
    per_row = jnp.where(valid, lse - tgt, 0.0)
    # mean over non-ignored rows (PyTorch returns NaN when all are ignored;
    # we return 0 in that degenerate case).
    return per_row.sum() / jnp.maximum(valid.sum(), 1).astype(jnp.float32)


# ----------------------------------------------------------------------------
# InferenceLayer in JAX; the hot path runs through the Pallas kernel above.
# ----------------------------------------------------------------------------
class Config:
    span_pruning = 0.3


class InferenceLayer:
    def __init__(self, config, key):
        self.config = config
        k1, k2, k3, k4 = jax.random.split(key, 4)
        bound = 1.0 / (HIDDEN ** 0.5)
        w_S = jax.random.uniform(k1, (HIDDEN, 1), jnp.float32, -bound, bound)
        w_E = jax.random.uniform(k2, (HIDDEN, 1), jnp.float32, -bound, bound)
        b_S = jax.random.uniform(k3, (1,), jnp.float32, -bound, bound)
        b_E = jax.random.uniform(k4, (1,), jnp.float32, -bound, bound)
        self.w = jnp.concatenate([w_S, w_E], axis=1)          # (768, 2)
        self.b = jnp.stack([b_S[0], b_E[0]]).reshape(1, 2)    # (1, 2)

    def span_pruning(self, pred, z, attention_mask):
        # TODO(synk): per-batch descending sort / top-k threshold kept in plain
        # JAX (no clean Pallas TPU equivalent for a full-row sort).
        mask_length = attention_mask.sum(axis=1) - 2                      # (B,)
        length = (mask_length.astype(jnp.float32) * z).astype(jnp.int32)  # trunc like .long()
        length = jnp.maximum(length, 5)
        max_length = mask_length * mask_length
        length = jnp.minimum(length, max_length)
        B = attention_mask.shape[0]
        pred_sort = -jnp.sort(-pred.reshape(B, -1), axis=-1)              # descending
        # length >= 0 always, so the index is >= -1; a -1 index wraps to the
        # last (smallest) element in BOTH PyTorch and JAX, so semantics match.
        topkth = pred_sort[jnp.arange(B), length - 1]                     # (B,)
        return pred >= topkth[:, None, None]

    def __call__(self, table, attention_mask, table_labels_S, table_labels_E,
                 aspect_pred_tags, opinion_pred_tags,
                 aspect_golde_tags, opinion_golde_tags,
                 biaffine_edge_S, biaffine_edge_E):
        outputs = {}

        S_pred, E_pred, loss_S, loss_E = table_head(
            table, biaffine_edge_S, biaffine_edge_E,
            table_labels_S, table_labels_E, self.w, self.b)
        outputs['table_loss_S'] = loss_S
        outputs['table_loss_E'] = loss_E

        aspect_loss = 0.1 * cross_entropy_ignore(aspect_pred_tags, aspect_golde_tags)
        opinion_loss = 0.1 * cross_entropy_ignore(opinion_pred_tags, opinion_golde_tags)

        if self.config.span_pruning != 0:
            table_predict_S = self.span_pruning(S_pred, self.config.span_pruning, attention_mask)
            table_predict_E = self.span_pruning(E_pred, self.config.span_pruning, attention_mask)
        else:
            table_predict_S = S_pred > 0.5
            table_predict_E = E_pred > 0.5

        outputs['table_predict_S'] = table_predict_S
        outputs['table_predict_E'] = table_predict_E
        outputs['table_labels_S'] = table_labels_S
        outputs['table_labels_E'] = table_labels_E
        outputs['aspect_preds_loss'] = aspect_loss
        outputs['opinion_preds_loss'] = opinion_loss
        return outputs


if __name__ == "__main__":
    B, L, T, C = 2, 12, 8, 6          # M = B*L*L = 288 -> exercises padding + a 3-step grid
    key = jax.random.PRNGKey(0)
    (k_tab, k_lS, k_lE, k_ap, k_op, k_ag, k_og,
     k_eS, k_eE, k_par) = jax.random.split(key, 10)

    # Encoder output slab in bf16 (realistic production dtype; halves the
    # dominant HBM read).  f32 tables are handled identically (no forced cast).
    table = jax.random.normal(k_tab, (B, L, L, HIDDEN), jnp.float32).astype(jnp.bfloat16)
    attention_mask = jnp.array(
        [[1] * L, [1] * (L - 2) + [0, 0]], dtype=jnp.int32)               # (B, L)
    table_labels_S = jax.random.randint(k_lS, (B, L, L), -1, 2, jnp.int32)
    table_labels_E = jax.random.randint(k_lE, (B, L, L), -1, 2, jnp.int32)
    aspect_pred_tags = jax.random.normal(k_ap, (B, T, C), jnp.float32)
    opinion_pred_tags = jax.random.normal(k_op, (B, T, C), jnp.float32)
    aspect_golde_tags = jax.random.randint(k_ag, (B, T), -1, C, jnp.int32)
    opinion_golde_tags = jax.random.randint(k_og, (B, T), -1, C, jnp.int32)
    biaffine_edge_S = 0.1 * jax.random.normal(k_eS, (B, L, L, 1), jnp.float32)
    biaffine_edge_E = 0.1 * jax.random.normal(k_eE, (B, L, L, 1), jnp.float32)

    layer = InferenceLayer(Config(), k_par)
    outputs = layer(table, attention_mask, table_labels_S, table_labels_E,
                    aspect_pred_tags, opinion_pred_tags,
                    aspect_golde_tags, opinion_golde_tags,
                    biaffine_edge_S, biaffine_edge_E)
    jax.block_until_ready(outputs)

    # Lightweight correctness cross-check against a pure-jnp reference
    # (same bf16 inputs; generous tolerance to absorb MXU vs XLA rounding).
    xt = table.reshape(-1, HIDDEN).astype(jnp.float32)
    lg_ref = (xt @ layer.w.astype(jnp.float32) + layer.b).reshape(B, L, L, 2)
    lgS = lg_ref[..., 0] * (1.0 + biaffine_edge_S[..., 0])
    wgt = (table_labels_S >= 0).astype(jnp.float32)
    tS = table_labels_S.astype(jnp.float32)
    bce_S = wgt * (tS * jnp.logaddexp(-lgS, 0.0) + (1.0 - tS) * jnp.logaddexp(lgS, 0.0))
    ref_loss_S = bce_S.mean()
    assert jnp.allclose(outputs['table_loss_S'], ref_loss_S, rtol=5e-2, atol=5e-3), \
        (outputs['table_loss_S'], ref_loss_S)

    print("KERNEL_OK")
</pallas_src>

<mosaic_0001>
module attributes {stable_mosaic.version = 11 : i64} {
  func.func @_table_head_kernel(%arg0: i32, %arg1: memref<128x768xbf16, #tpu.memory_space<vmem>>, %arg2: memref<768x2xbf16, #tpu.memory_space<vmem>>, %arg3: memref<1x2xf32, #tpu.memory_space<vmem>>, %arg4: memref<4x128xf32, #tpu.memory_space<vmem>>, %arg5: memref<2x128xf32, #tpu.memory_space<vmem>>, %arg6: memref<2x128xf32, #tpu.memory_space<vmem>>) attributes {dimension_semantics = [#tpu.dimension_semantics<parallel>], iteration_bounds = array<i64: 3>, scalar_prefetch = 0 : i64, scratch_operands = 0 : i64, tpu.core_type = #tpu.core_type<tc>, window_params = [{transform_indices = @transform_0, window_bounds = array<i64: 128, 768>}, {pipeline_mode = #tpu.pipeline_mode<synchronous>, transform_indices = @transform_1, window_bounds = array<i64: 768, 2>}, {pipeline_mode = #tpu.pipeline_mode<synchronous>, transform_indices = @transform_2, window_bounds = array<i64: 1, 2>}, {transform_indices = @transform_3, window_bounds = array<i64: 4, 128>}, {transform_indices = @transform_4, window_bounds = array<i64: 2, 128>}, {transform_indices = @transform_5, window_bounds = array<i64: 2, 128>}]} {
    %c0 = arith.constant 0 : index
    %c0_0 = arith.constant 0 : index
    %0 = vector.load %arg1[%c0, %c0_0] : memref<128x768xbf16, #tpu.memory_space<vmem>>, vector<128x768xbf16>
    %c0_1 = arith.constant 0 : index
    %c0_2 = arith.constant 0 : index
    %1 = vector.load %arg2[%c0_1, %c0_2] : memref<768x2xbf16, #tpu.memory_space<vmem>>, vector<768x2xbf16>
    %cst = arith.constant dense<0.000000e+00> : vector<128x2xf32>
    %2 = tpu.matmul %0, %1, %cst {dimension_numbers = #tpu.dot_dimension_numbers<[1], [0], [0], [1], [0, 0, 1, 1], [], []>} : vector<128x768xbf16>, vector<768x2xbf16>, vector<128x2xf32> -> vector<128x2xf32>
    %c0_3 = arith.constant 0 : index
    %c0_4 = arith.constant 0 : index
    %3 = vector.load %arg3[%c0_3, %c0_4] : memref<1x2xf32, #tpu.memory_space<vmem>>, vector<1x2xf32>
    %4 = vector.broadcast %3 : vector<1x2xf32> to vector<128x2xf32>
    %5 = arith.addf %2, %4 : vector<128x2xf32>
    %6 = tpu.transpose %5, [1, 0] : vector<128x2xf32> -> vector<2x128xf32>
    %c0_5 = arith.constant 0 : index
    %c0_6 = arith.constant 0 : index
    %7 = vector.load %arg4[%c0_5, %c0_6] : memref<4x128xf32, #tpu.memory_space<vmem>>, vector<4x128xf32>
    %8 = vector.extract_strided_slice %7 {offsets = [0, 0], sizes = [2, 128], strides = [1, 1]} : vector<4x128xf32> to vector<2x128xf32>
    %9 = vector.extract_strided_slice %7 {offsets = [2, 0], sizes = [2, 128], strides = [1, 1]} : vector<4x128xf32> to vector<2x128xf32>
    %cst_7 = arith.constant 1.000000e+00 : f32
    %10 = vector.broadcast %cst_7 : f32 to vector<2x128xf32>
    %11 = arith.addf %10, %8 : vector<2x128xf32>
    %12 = arith.mulf %6, %11 : vector<2x128xf32>
    %13 = vector.extract_strided_slice %7 {offsets = [2, 0], sizes = [1, 128], strides = [1, 1]} : vector<4x128xf32> to vector<1x128xf32>
    %cst_8 = arith.constant 0.000000e+00 : f32
    %14 = vector.broadcast %cst_8 : f32 to vector<1x128xf32>
    %15 = arith.cmpf oge, %13, %14 : vector<1x128xf32>
    %16 = arith.extui %15 : vector<1x128xi1> to vector<1x128xi32>
    %17 = arith.sitofp %16 : vector<1x128xi32> to vector<1x128xf32>
    %cst_9 = arith.constant 0.000000e+00 : f32
    %18 = vector.broadcast %cst_9 : f32 to vector<2x128xf32>
    %19 = arith.subf %18, %12 : vector<2x128xf32>
    %cst_10 = arith.constant 0.000000e+00 : f32
    %20 = vector.broadcast %cst_10 : f32 to vector<2x128xf32>
    %21 = arith.maximumf %19, %20 : vector<2x128xf32>
    %22 = vector.broadcast %cst_10 : f32 to vector<2x128xf32>
    %23 = arith.subf %19, %22 : vector<2x128xf32>
    %24 = arith.cmpf one, %23, %23 : vector<2x128xf32>
    %25 = vector.broadcast %cst_10 : f32 to vector<2x128xf32>
    %26 = arith.addf %19, %25 : vector<2x128xf32>
    %27 = math.absf %23 : vector<2x128xf32>
    %cst_11 = arith.constant 0.000000e+00 : f32
    %28 = vector.broadcast %cst_11 : f32 to vector<2x128xf32>
    %29 = arith.subf %28, %27 : vector<2x128xf32>
    %30 = math.exp %29 : vector<2x128xf32>
    %31 = math.log1p %30 : vector<2x128xf32>
    %32 = arith.addf %21, %31 : vector<2x128xf32>
    %33 = arith.select %24, %26, %32 : vector<2x128xi1>, vector<2x128xf32>
    %cst_12 = arith.constant 0.000000e+00 : f32
    %34 = vector.broadcast %cst_12 : f32 to vector<2x128xf32>
    %35 = arith.maximumf %12, %34 : vector<2x128xf32>
    %36 = vector.broadcast %cst_12 : f32 to vector<2x128xf32>
    %37 = arith.subf %12, %36 : vector<2x128xf32>
    %38 = arith.cmpf one, %37, %37 : vector<2x128xf32>
    %39 = vector.broadcast %cst_12 : f32 to vector<2x128xf32>
    %40 = arith.addf %12, %39 : vector<2x128xf32>
    %41 = math.absf %37 : vector<2x128xf32>
    %cst_13 = arith.constant 0.000000e+00 : f32
    %42 = vector.broadcast %cst_13 : f32 to vector<2x128xf32>
    %43 = arith.subf %42, %41 : vector<2x128xf32>
    %44 = math.exp %43 : vector<2x128xf32>
    %45 = math.log1p %44 : vector<2x128xf32>
    %46 = arith.addf %35, %45 : vector<2x128xf32>
    %47 = arith.select %38, %40, %46 : vector<2x128xi1>, vector<2x128xf32>
    %48 = arith.mulf %9, %33 : vector<2x128xf32>
    %cst_14 = arith.constant 1.000000e+00 : f32
    %49 = vector.broadcast %cst_14 : f32 to vector<2x128xf32>
    %50 = arith.subf %49, %9 : vector<2x128xf32>
    %51 = arith.mulf %50, %47 : vector<2x128xf32>
    %52 = arith.addf %48, %51 : vector<2x128xf32>
    %53 = vector.broadcast %17 : vector<1x128xf32> to vector<2x128xf32>
    %54 = arith.mulf %53, %52 : vector<2x128xf32>
    %55 = arith.negf %12 : vector<2x128xf32>
    %56 = math.exp %55 : vector<2x128xf32>
    %cst_15 = arith.constant 1.000000e+00 : f32
    %57 = vector.broadcast %cst_15 : f32 to vector<2x128xf32>
    %58 = arith.addf %57, %56 : vector<2x128xf32>
    %59 = arith.divf %57, %58 : vector<2x128xf32>
    %60 = vector.broadcast %17 : vector<1x128xf32> to vector<2x128xf32>
    %61 = arith.mulf %59, %60 : vector<2x128xf32>
    %c0_16 = arith.constant 0 : index
    %c0_17 = arith.constant 0 : index
    %62 = vector.load %arg5[%c0_16, %c0_17] : memref<2x128xf32, #tpu.memory_space<vmem>>, vector<2x128xf32>
    tpu.vector_store %arg5[%c0_16, %c0_17], %61 {strides = array<i32>} : memref<2x128xf32, #tpu.memory_space<vmem>>, vector<2x128xf32>,
    %cst_18 = arith.constant dense<0.000000e+00> : vector<2xf32>
    %63 = vector.multi_reduction <add>, %54, %cst_18 [1] : vector<2x128xf32> to vector<2xf32>
    %64 = vector.shape_cast %63 : vector<2xf32> to vector<2x1xf32>
    %65 = tpu.iota {dimensions = array<i32: 1>} : vector<2x128xi32>
    %c0_i32 = arith.constant 0 : i32
    %66 = vector.broadcast %c0_i32 : i32 to vector<2x128xi32>
    %67 = arith.cmpi eq, %65, %66 : vector<2x128xi32>
    %cst_19 = arith.constant 0.000000e+00 : f32
    %68 = vector.shape_cast %64 : vector<2x1xf32> to vector<2x1xf32>
    %69 = vector.broadcast %68 : vector<2x1xf32> to vector<2x128xf32>
    %70 = vector.broadcast %cst_19 : f32 to vector<2x128xf32>
    %71 = arith.select %67, %69, %70 : vector<2x128xi1>, vector<2x128xf32>
    %c0_20 = arith.constant 0 : index
    %c0_21 = arith.constant 0 : index
    %72 = vector.load %arg6[%c0_20, %c0_21] : memref<2x128xf32, #tpu.memory_space<vmem>>, vector<2x128xf32>
    tpu.vector_store %arg6[%c0_20, %c0_21], %71 {strides = array<i32>} : memref<2x128xf32, #tpu.memory_space<vmem>>, vector<2x128xf32>,
    return
  }
  func.func @transform_0(%arg0: i32) -> (i32, i32) {
    %c0_i32 = arith.constant 0 : i32
    %c0_i32_0 = arith.constant 0 : i32
    return %arg0, %c0_i32 : i32, i32
  }
  func.func @transform_1(%arg0: i32) -> (i32, i32) {
    %c0_i32 = arith.constant 0 : i32
    %c0_i32_0 = arith.constant 0 : i32
    %c0_i32_1 = arith.constant 0 : i32
    return %c0_i32, %c0_i32_0 : i32, i32
  }
  func.func @transform_2(%arg0: i32) -> (i32, i32) {
    %c0_i32 = arith.constant 0 : i32
    %c0_i32_0 = arith.constant 0 : i32
    %c0_i32_1 = arith.constant 0 : i32
    return %c0_i32, %c0_i32_0 : i32, i32
  }
  func.func @transform_3(%arg0: i32) -> (i32, i32) {
    %c0_i32 = arith.constant 0 : i32
    %c0_i32_0 = arith.constant 0 : i32
    return %c0_i32, %arg0 : i32, i32
  }
  func.func @transform_4(%arg0: i32) -> (i32, i32) {
    %c0_i32 = arith.constant 0 : i32
    %c0_i32_0 = arith.constant 0 : i32
    return %c0_i32, %arg0 : i32, i32
  }
  func.func @transform_5(%arg0: i32) -> (i32, i32) {
    %c0_i32 = arith.constant 0 : i32
    %c0_i32_0 = arith.constant 0 : i32
    return %c0_i32, %arg0 : i32, i32
  }
}

</mosaic_0001>

<llo_original>
// kernel: tpu_custom_call.1
$region0: #{tpu_custom_call.1}
  #allocation0 [shape = 'u32[]', space=smem, size = 0x4, offset = 0x4, fixed_abs, tag = 'smem constant byte address 0x4 - core index']
  #allocation1 [shape = 'u32[144,128]{1,0:T(1,128)}', space=vmem, size = 0x12000, scoped, tag = 'internal scratch']
  %s0 = inlined_call_operand.hbm [shape: bf16[384,768], index: 0, kind: input, shape index: {}]
  %s1 = inlined_call_operand.vmem [shape: bf16[768,2], index: 1, kind: input, shape index: {}]
  %s2 = inlined_call_operand.vmem [shape: f32[1,2], index: 2, kind: input, shape index: {}]
  %s3 = inlined_call_operand.vmem [shape: f32[4,384], index: 3, kind: input, shape index: {}]
  %s4 = inlined_call_operand.hbm [shape: f32[2,384], index: 4, kind: output, shape index: {0}]
  %s5 = inlined_call_operand.hbm [shape: f32[2,384], index: 5, kind: output, shape index: {1}]
  %6 = xla_tuple %s4, %s5
  %s7 = sld [smem:[#allocation0]]
  $region61: #{tpu_custom_call.1} parent=0
    _
  %s9 = ssub.s32 1, %s7
  %s10 = scalar_select 0, %s9, %s7
  $region1: #{tpu_custom_call.1} parent=0
    #allocation2 [shape = 'u8[393216]{0}', space=vmem, size = 0x60000, scoped, tag = 'input window, operand 0']
    #allocation3 [shape = 's32[2]{0}', space=sflag, size = 0x8, scoped, tag = 'scoped memory for tpu_custom_call.1']
    #allocation4 [shape = 's32[2]{0}', space=sflag, size = 0x8, scoped, tag = 'scoped memory for tpu_custom_call.1']
    #allocation5 [shape = 'u8[2048]{0}', space=vmem, size = 0x800, scoped, tag = 'output window, operand 0']
    #allocation6 [shape = 'u8[2048]{0}', space=vmem, size = 0x800, scoped, tag = 'output window, operand 1']
    #allocation7 [shape = 's32[2]{0}', space=sflag, size = 0x8, scoped, tag = 'scoped memory for tpu_custom_call.1']
    %11 = vsyncpa [#allocation3], 0
    %s12 = scalar_lea.sflag [#allocation3], 1
    %13 = vsyncpa %s12, 0
    %14 = vsyncpa [#allocation4], 0
    %s15 = scalar_lea.sflag [#allocation4], 1
    %16 = vsyncpa %s15, 0
    %17 = vsyncpa [#allocation7], 0
    %s18 = scalar_lea.sflag [#allocation7], 1
    %19 = vsyncpa %s18, 0
    loop: start=0, step=1, limit=5
    $region2: #{tpu_custom_call.1} parent=1 // loop_pre_header
      _
    $region3: #{tpu_custom_call.1} parent=1 // loop_header
      %s21 = sphi 0, %s25
      %p22 = scmp.ge.s32.totalorder %s21, 5
      %s31 = sphi 0, %s33
      %s34 = sphi 0, %s31
      %s35 = sphi 0, %s34
      %s51 = sphi 0, %s35
      %s55 = sphi 0, %s55
      %s57 = sphi 0, %s55
      %s58 = sphi 0, %s57
      %s72 = sphi 0, %s58
      %s76 = sphi 0, %s76
      %s78 = sphi 0, %s76
      %s79 = sphi 0, %s78
      %s93 = sphi 0, %s79
      %s99 = sphi 0, %s101
      %s102 = sphi 0, %s99
      %s103 = sphi 0, %s102
      %s119 = sphi 0, %s103
      %s125 = sphi 0, %s127
      %s128 = sphi 0, %s125
      %s129 = sphi 0, %s128
      %s145 = sphi 0, %s129
      %s151 = sphi 0, %s153
      %s154 = sphi 0, %s151
      %s155 = sphi 0, %s154
      %s171 = sphi 0, %s155
    $region4: #{tpu_custom_call.1} parent=1 // loop_header_branch
      %24 = sbr.rel (%p22) target = $region8
    $region5: #{tpu_custom_call.1} parent=1 // loop_body
      %s26 = ssub.s32 %s21, 1
      %s27 = ssub.s32 %s21, 2
      %s28 = sadd.s32 %s21, 1
      %s29 = ssub.s32 %s21, %s28
      %p30 = scmp.eq.s32.totalorder %s29, 0
      %s32 = sadd.s32 %s31, 1
      %s33 = scalar_select %p30, %s31, %s32
      %p36 = pneg %p30
      %p37 = scmp.eq.s32.totalorder %s21, 2
      %p38 = por %p36, %p37
      %p39 = scmp.ne.s32.totalorder %s31, %s34
      %p40 = scmp.eq.s32.totalorder %s21, 0
      %p41 = por %p39, %p40
      %p42 = scmp.ne.s32.totalorder %s31, %s34
      %p43 = scmp.eq.s32.totalorder %s26, 2
      %p44 = por %p42, %p43
      %p45 = scmp.ne.s32.totalorder %s34, %s35
      %p46 = scmp.eq.s32.totalorder %s26, 0
      %p47 = por %p45, %p46
      %p48 = scmp.ne.s32.totalorder %s34, %s35
      %p49 = scmp.eq.s32.totalorder %s27, 2
      %p50 = por %p48, %p49
      %p52 = scmp.ne.s32.totalorder %s35, %s51
      %p53 = scmp.eq.s32.totalorder %s27, 0
      %p54 = por %p52, %p53
      %s56 = sadd.s32 %s55, 1
      %p59 = scmp.eq.s32.totalorder %s21, 2
      %p60 = scmp.ne.s32.totalorder %s55, %s57
      %p61 = scmp.eq.s32.totalorder %s21, 0
      %p62 = por %p60, %p61
      %p63 = scmp.ne.s32.totalorder %s55, %s57
      %p64 = scmp.eq.s32.totalorder %s26, 2
      %p65 = por %p63, %p64
      %p66 = scmp.ne.s32.totalorder %s57, %s58
      %p67 = scmp.eq.s32.totalorder %s26, 0
      %p68 = por %p66, %p67
      %p69 = scmp.ne.s32.totalorder %s57, %s58
      %p70 = scmp.eq.s32.totalorder %s27, 2
      %p71 = por %p69, %p70
      %p73 = scmp.ne.s32.totalorder %s58, %s72
      %p74 = scmp.eq.s32.totalorder %s27, 0
      %p75 = por %p73, %p74
      %s77 = sadd.s32 %s76, 1
      %p80 = scmp.eq.s32.totalorder %s21, 2
      %p81 = scmp.ne.s32.totalorder %s76, %s78
      %p82 = scmp.eq.s32.totalorder %s21, 0
      %p83 = por %p81, %p82
      %p84 = scmp.ne.s32.totalorder %s76, %s78
      %p85 = scmp.eq.s32.totalorder %s26, 2
      %p86 = por %p84, %p85
      %p87 = scmp.ne.s32.totalorder %s78, %s79
      %p88 = scmp.eq.s32.totalorder %s26, 0
      %p89 = por %p87, %p88
      %p90 = scmp.ne.s32.totalorder %s78, %s79
      %p91 = scmp.eq.s32.totalorder %s27, 2
      %p92 = por %p90, %p91
      %p94 = scmp.ne.s32.totalorder %s79, %s93
      %p95 = scmp.eq.s32.totalorder %s27, 0
      %p96 = por %p94, %p95
      %s97 = ssub.s32 %s21, %s28
      %p98 = scmp.eq.s32.totalorder %s97, 0
      %s100 = sadd.s32 %s99, 1
      %s101 = scalar_select %p98, %s99, %s100
      %p104 = pneg %p98
      %p105 = scmp.eq.s32.totalorder %s21, 2
      %p106 = por %p104, %p105
      %p107 = scmp.ne.s32.totalorder %s99, %s102
      %p108 = scmp.eq.s32.totalorder %s21, 0
      %p109 = por %p107, %p108
      %p110 = scmp.ne.s32.totalorder %s99, %s102
      %p111 = scmp.eq.s32.totalorder %s26, 2
      %p112 = por %p110, %p111
      %p113 = scmp.ne.s32.totalorder %s102, %s103
      %p114 = scmp.eq.s32.totalorder %s26, 0
      %p115 = por %p113, %p114
      %p116 = scmp.ne.s32.totalorder %s102, %s103
      %p117 = scmp.eq.s32.totalorder %s27, 2
      %p118 = por %p116, %p117
      %p120 = scmp.ne.s32.totalorder %s103, %s119
      %p121 = scmp.eq.s32.totalorder %s27, 0
      %p122 = por %p120, %p121
      %s123 = ssub.s32 %s21, %s28
      %p124 = scmp.eq.s32.totalorder %s123, 0
      %s126 = sadd.s32 %s125, 1
      %s127 = scalar_select %p124, %s125, %s126
      %p130 = pneg %p124
      %p131 = scmp.eq.s32.totalorder %s21, 2
      %p132 = por %p130, %p131
      %p133 = scmp.ne.s32.totalorder %s125, %s128
      %p134 = scmp.eq.s32.totalorder %s21, 0
      %p135 = por %p133, %p134
      %p136 = scmp.ne.s32.totalorder %s125, %s128
      %p137 = scmp.eq.s32.totalorder %s26, 2
      %p138 = por %p136, %p137
      %p139 = scmp.ne.s32.totalorder %s128, %s129
      %p140 = scmp.eq.s32.totalorder %s26, 0
      %p141 = por %p139, %p140
      %p142 = scmp.ne.s32.totalorder %s128, %s129
      %p143 = scmp.eq.s32.totalorder %s27, 2
      %p144 = por %p142, %p143
      %p146 = scmp.ne.s32.totalorder %s129, %s145
      %p147 = scmp.eq.s32.totalorder %s27, 0
      %p148 = por %p146, %p147
      %s149 = ssub.s32 %s21, %s28
      %p150 = scmp.eq.s32.totalorder %s149, 0
      %s152 = sadd.s32 %s151, 1
      %s153 = scalar_select %p150, %s151, %s152
      %p156 = pneg %p150
      %p157 = scmp.eq.s32.totalorder %s21, 2
      %p158 = por %p156, %p157
      %p159 = scmp.ne.s32.totalorder %s151, %s154
      %p160 = scmp.eq.s32.totalorder %s21, 0
      %p161 = por %p159, %p160
      %p162 = scmp.ne.s32.totalorder %s151, %s154
      %p163 = scmp.eq.s32.totalorder %s26, 2
      %p164 = por %p162, %p163
      %p165 = scmp.ne.s32.totalorder %s154, %s155
      %p166 = scmp.eq.s32.totalorder %s26, 0
      %p167 = por %p165, %p166
      %p168 = scmp.ne.s32.totalorder %s154, %s155
      %p169 = scmp.eq.s32.totalorder %s27, 2
      %p170 = por %p168, %p169
      %p172 = scmp.ne.s32.totalorder %s155, %s171
      %p173 = scmp.eq.s32.totalorder %s27, 0
      %p174 = por %p172, %p173
      %p175 = scmp.le.s32.totalorder 1, %s21
      %p176 = scmp.lt.s32.totalorder %s21, 4
      %p177 = pnand %p175, %p176
      %p178 = pneg %p177
      // Predicated region
      $region9: #{tpu_custom_call.1} parent=5 // pred_check
        _
      $region10: #{tpu_custom_call.1} parent=5 // pred_check_branch
        %180 = sbr.rel (%p177) target = $region12
      $region11: #{tpu_custom_call.1} parent=5 // pred_region
        %s181 = ssub.s32 %s21, 1
        // Predicated region
        $region13: #{tpu_custom_call.1} parent=11 // pred_check
          %p182 = pneg %p68
        $region14: #{tpu_custom_call.1} parent=11 // pred_check_branch
          %184 = sbr.rel (%p182) target = $region16
        $region15: #{tpu_custom_call.1} parent=11 // pred_region
          _
        $region16: #{tpu_custom_call.1} parent=11 // pred_fallthru
          _
        // Predicated region
        $region17: #{tpu_custom_call.1} parent=11 // pred_check
          %p185 = pneg %p89
        $region18: #{tpu_custom_call.1} parent=11 // pred_check_branch
          %187 = sbr.rel (%p185) target = $region20
        $region19: #{tpu_custom_call.1} parent=11 // pred_region
          _
        $region20: #{tpu_custom_call.1} parent=11 // pred_fallthru
          _
      $region12: #{tpu_custom_call.1} parent=5 // pred_fallthru
        _
      %p188 = scmp.lt.s32.totalorder %s21, 3
      // Predicated region
      $region21: #{tpu_custom_call.1} parent=5 // pred_check
        %p189 = pneg %p188
      $region22: #{tpu_custom_call.1} parent=5 // pred_check_branch
        %191 = sbr.rel (%p189) target = $region24
      $region23: #{tpu_custom_call.1} parent=5 // pred_region
        // Predicated region
        $region25: #{tpu_custom_call.1} parent=23 // pred_check
          %p192 = pneg %p41
        $region26: #{tpu_custom_call.1} parent=23 // pred_check_branch
          %194 = sbr.rel (%p192) target = $region28
        $region27: #{tpu_custom_call.1} parent=23 // pred_region
          %s195 = sand.u32 %s31, 1
          %s196 = scalar_lea.sflag [#allocation3], %s195
          %s197 = sand.u32 %s31, 1
          %s198 = smul.addr %s197, 384
          %s199 = scalar_lea.vmem [#allocation2], %s198
          %s200 = smul.u32 16, %s21
          %s202 = ssub.s32 6144, 6144
          %203 = vsyncadd %s196, %s202
          %s204 = smul.addr %s200, 6
          %s205 = smul.addr %s204, 64
          %s206 = scalar_lea.hbm %s0, %s205
          %s207 = sshll.u32 %s199, 4
          %s208 = int_to_ptr.vmem [resolvable:$true] %s207
          %213 = dma.hbm_to_vmem [thread:$0]  %s206, 6144, %s208, %s196, 384, 384, 24
        $region28: #{tpu_custom_call.1} parent=23 // pred_fallthru
          _
        // Predicated region
        $region29: #{tpu_custom_call.1} parent=23 // pred_check
          %p214 = pneg %p109
        $region30: #{tpu_custom_call.1} parent=23 // pred_check_branch
          %216 = sbr.rel (%p214) target = $region32
        $region31: #{tpu_custom_call.1} parent=23 // pred_region
          %p217 = scmp.lt.s32.totalorder %s21, 2
          %s218 = scalar_select %p217, %s21, 2
          %s219 = smul.addr %s218, 4
          %s220 = scalar_lea.vmem %s3, %s219
        $region32: #{tpu_custom_call.1} parent=23 // pred_fallthru
          _
      $region24: #{tpu_custom_call.1} parent=5 // pred_fallthru
        _
      %p221 = scmp.le.s32.totalorder 1, %s21
      %p222 = scmp.lt.s32.totalorder %s21, 4
      %p223 = pnand %p221, %p222
      %p224 = pneg %p223
      // Predicated region
      $region33: #{tpu_custom_call.1} parent=5 // pred_check
        _
      $region34: #{tpu_custom_call.1} parent=5 // pred_check_branch
        %226 = sbr.rel (%p223) target = $region36
      $region35: #{tpu_custom_call.1} parent=5 // pred_region
        %s227 = ssub.s32 %s21, 1
        %s228 = sand.u32 %s34, 1
        %s229 = scalar_lea.sflag [#allocation3], %s228
        %s230 = sand.u32 %s34, 1
        %s231 = smul.addr %s230, 384
        %s232 = scalar_lea.vmem [#allocation2], %s231
        // Predicated region
        $region37: #{tpu_custom_call.1} parent=35 // pred_check
          %p233 = pneg %p47
        $region38: #{tpu_custom_call.1} parent=35 // pred_check_branch
          %235 = sbr.rel (%p233) target = $region40
        $region39: #{tpu_custom_call.1} parent=35 // pred_region
          %236 = dma.done %s229, 6144
        $region40: #{tpu_custom_call.1} parent=35 // pred_fallthru
          _
        %s237 = sand.u32 %s34, 1
        %s238 = scalar_lea.sflag [#allocation3], %s237
        %s239 = sand.u32 %s34, 1
        %s240 = smul.addr %s239, 384
        %s241 = scalar_lea.vmem [#allocation2], %s240
        %p242 = pneg %p47
        %p243 = pneg %p44
        %p244 = pneg %p68
        %p245 = pneg %p65
        %p246 = pneg %p89
        %p247 = pneg %p86
        %p248 = scmp.lt.s32.totalorder %s26, 2
        %s249 = scalar_select %p248, %s26, 2
        %s250 = smul.addr %s249, 4
        %s251 = scalar_lea.vmem %s3, %s250
        %p252 = pneg %p115
        %p253 = pneg %p112
        %p254 = pneg %p141
        %p255 = pneg %p138
        %s256 = sand.u32 %s128, 1
        %s257 = scalar_lea.sflag [#allocation4], %s256
        %s258 = sand.u32 %s128, 1
        %s259 = smul.addr %s258, 2
        %s260 = scalar_lea.vmem [#allocation5], %s259
        %p261 = pneg %p167
        %p262 = pneg %p164
        %s263 = sand.u32 %s154, 1
        %s264 = scalar_lea.sflag [#allocation7], %s263
        %s265 = sand.u32 %s154, 1
        %s266 = smul.addr %s265, 2
        %s267 = scalar_lea.vmem [#allocation6], %s266
        %s268 = smul.u32 16, %s26
        %p269 = scmp.lt.s32.totalorder %s26, 2
        %s270 = scalar_select %p269, %s26, 2
        %s271 = smul.addr %s270, 4
        %s272 = scalar_lea.vmem %s3, %s271
        %v274 = vld [vmem:[%s232] sm:$0xff]
        %v275 = vld [vmem:[%s232 + $0x8] sm:$0xff]
        %v276 = vld [vmem:[%s232 + $0x10] sm:$0xff]
        %v277 = vld [vmem:[%s232 + $0x18] sm:$0xff]
        %v278 = vld [vmem:[%s232 + $0x20] sm:$0xff]
        %v279 = vld [vmem:[%s232 + $0x28] sm:$0xff]
        %v280 = vld [vmem:[%s232 + $0x30] sm:$0xff]
        %v281 = vld [vmem:[%s232 + $0x38] sm:$0xff]
        %v282 = vld [vmem:[%s232 + $0x40] sm:$0xff]
        %v283 = vld [vmem:[%s232 + $0x48] sm:$0xff]
        %v284 = vld [vmem:[%s232 + $0x50] sm:$0xff]
        %v285 = vld [vmem:[%s232 + $0x58] sm:$0xff]
        %v286 = vld [vmem:[%s232 + $0x60] sm:$0xff]
        %v287 = vld [vmem:[%s232 + $0x68] sm:$0xff]
        %v288 = vld [vmem:[%s232 + $0x70] sm:$0xff]
        %v289 = vld [vmem:[%s232 + $0x78] sm:$0xff]
        %v290 = vld [vmem:[%s232 + $0x80] sm:$0xff]
        %v291 = vld [vmem:[%s232 + $0x88] sm:$0xff]
        %v292 = vld [vmem:[%s232 + $0x90] sm:$0xff]
        %v293 = vld [vmem:[%s232 + $0x98] sm:$0xff]
        %v294 = vld [vmem:[%s232 + $0xa0] sm:$0xff]
        %v295 = vld [vmem:[%s232 + $0xa8] sm:$0xff]
        %v296 = vld [vmem:[%s232 + $0xb0] sm:$0xff]
        %v297 = vld [vmem:[%s232 + $0xb8] sm:$0xff]
        %v298 = vld [vmem:[%s232 + $0xc0] sm:$0xff]
        %v299 = vld [vmem:[%s232 + $0xc8] sm:$0xff]
        %v300 = vld [vmem:[%s232 + $0xd0] sm:$0xff]
        %v301 = vld [vmem:[%s232 + $0xd8] sm:$0xff]
        %v302 = vld [vmem:[%s232 + $0xe0] sm:$0xff]
        %v303 = vld [vmem:[%s232 + $0xe8] sm:$0xff]
        %v304 = vld [vmem:[%s232 + $0xf0] sm:$0xff]
        %v305 = vld [vmem:[%s232 + $0xf8] sm:$0xff]
        %v306 = vld [vmem:[%s232 + $0x100] sm:$0xff]
        %v307 = vld [vmem:[%s232 + $0x108] sm:$0xff]
        %v308 = vld [vmem:[%s232 + $0x110] sm:$0xff]
        %v309 = vld [vmem:[%s232 + $0x118] sm:$0xff]
        %v310 = vld [vmem:[%s232 + $0x120] sm:$0xff]
        %v311 = vld [vmem:[%s232 + $0x128] sm:$0xff]
        %v312 = vld [vmem:[%s232 + $0x130] sm:$0xff]
        %v313 = vld [vmem:[%s232 + $0x138] sm:$0xff]
        %v314 = vld [vmem:[%s232 + $0x140] sm:$0xff]
        %v315 = vld [vmem:[%s232 + $0x148] sm:$0xff]
        %v316 = vld [vmem:[%s232 + $0x150] sm:$0xff]
        %v317 = vld [vmem:[%s232 + $0x158] sm:$0xff]
        %v318 = vld [vmem:[%s232 + $0x160] sm:$0xff]
        %v319 = vld [vmem:[%s232 + $0x168] sm:$0xff]
        %v320 = vld [vmem:[%s232 + $0x170] sm:$0xff]
        %v321 = vld [vmem:[%s232 + $0x178] sm:$0xff]
        %v322 = vld [vmem:[%s1] sm:$0xf]
        %v323 = vld [vmem:[%s1 + $0x4] sm:$0xf]
        %v324 = vld [vmem:[%s1 + $0x8] sm:$0xf]
        %v325 = vld [vmem:[%s1 + $0xc] sm:$0xf]
        %v326 = vld [vmem:[%s1 + $0x10] sm:$0xf]
        %v327 = vld [vmem:[%s1 + $0x14] sm:$0xf]
        %v328 = vld [vmem:[%s1 + $0x18] sm:$0xf]
        %v329 = vld [vmem:[%s1 + $0x1c] sm:$0xf]
        %v330 = vld [vmem:[%s1 + $0x20] sm:$0xf]
        %v331 = vld [vmem:[%s1 + $0x24] sm:$0xf]
        %v332 = vld [vmem:[%s1 + $0x28] sm:$0xf]
        %v333 = vld [vmem:[%s1 + $0x2c] sm:$0xf]
        %v334 = vld [vmem:[%s1 + $0x30] sm:$0xf]
        %v335 = vld [vmem:[%s1 + $0x34] sm:$0xf]
        %v336 = vld [vmem:[%s1 + $0x38] sm:$0xf]
        %v337 = vld [vmem:[%s1 + $0x3c] sm:$0xf]
        %v338 = vld [vmem:[%s1 + $0x40] sm:$0xf]
        %v339 = vld [vmem:[%s1 + $0x44] sm:$0xf]
        %v340 = vld [vmem:[%s1 + $0x48] sm:$0xf]
        %v341 = vld [vmem:[%s1 + $0x4c] sm:$0xf]
        %v342 = vld [vmem:[%s1 + $0x50] sm:$0xf]
        %v343 = vld [vmem:[%s1 + $0x54] sm:$0xf]
        %v344 = vld [vmem:[%s1 + $0x58] sm:$0xf]
        %v345 = vld [vmem:[%s1 + $0x5c] sm:$0xf]
        %v346 = vld [vmem:[%s1 + $0x60] sm:$0xf]
        %v347 = vld [vmem:[%s1 + $0x64] sm:$0xf]
        %v348 = vld [vmem:[%s1 + $0x68] sm:$0xf]
        %v349 = vld [vmem:[%s1 + $0x6c] sm:$0xf]
        %v350 = vld [vmem:[%s1 + $0x70] sm:$0xf]
        %v351 = vld [vmem:[%s1 + $0x74] sm:$0xf]
        %v352 = vld [vmem:[%s1 + $0x78] sm:$0xf]
        %v353 = vld [vmem:[%s1 + $0x7c] sm:$0xf]
        %v354 = vld [vmem:[%s1 + $0x80] sm:$0xf]
        %v355 = vld [vmem:[%s1 + $0x84] sm:$0xf]
        %v356 = vld [vmem:[%s1 + $0x88] sm:$0xf]
        %v357 = vld [vmem:[%s1 + $0x8c] sm:$0xf]
        %v358 = vld [vmem:[%s1 + $0x90] sm:$0xf]
        %v359 = vld [vmem:[%s1 + $0x94] sm:$0xf]
        %v360 = vld [vmem:[%s1 + $0x98] sm:$0xf]
        %v361 = vld [vmem:[%s1 + $0x9c] sm:$0xf]
        %v362 = vld [vmem:[%s1 + $0xa0] sm:$0xf]
        %v363 = vld [vmem:[%s1 + $0xa4] sm:$0xf]
        %v364 = vld [vmem:[%s1 + $0xa8] sm:$0xf]
        %v365 = vld [vmem:[%s1 + $0xac] sm:$0xf]
        %v366 = vld [vmem:[%s1 + $0xb0] sm:$0xf]
        %v367 = vld [vmem:[%s1 + $0xb4] sm:$0xf]
        %v368 = vld [vmem:[%s1 + $0xb8] sm:$0xf]
        %v369 = vld [vmem:[%s1 + $0xbc] sm:$0xf]
        %v370 = vld [vmem:[%s1 + $0xc0] sm:$0xf]
        %v371 = vld [vmem:[%s1 + $0xc4] sm:$0xf]
        %v372 = vld [vmem:[%s1 + $0xc8] sm:$0xf]
        %v373 = vld [vmem:[%s1 + $0xcc] sm:$0xf]
        %v374 = vld [vmem:[%s1 + $0xd0] sm:$0xf]
        %v375 = vld [vmem:[%s1 + $0xd4] sm:$0xf]
        %v376 = vld [vmem:[%s1 + $0xd8] sm:$0xf]
        %v377 = vld [vmem:[%s1 + $0xdc] sm:$0xf]
        %v378 = vld [vmem:[%s1 + $0xe0] sm:$0xf]
        %v379 = vld [vmem:[%s1 + $0xe4] sm:$0xf]
        %v380 = vld [vmem:[%s1 + $0xe8] sm:$0xf]
        %v381 = vld [vmem:[%s1 + $0xec] sm:$0xf]
        %v382 = vld [vmem:[%s1 + $0xf0] sm:$0xf]
        %v383 = vld [vmem:[%s1 + $0xf4] sm:$0xf]
        %v384 = vld [vmem:[%s1 + $0xf8] sm:$0xf]
        %v385 = vld [vmem:[%s1 + $0xfc] sm:$0xf]
        %v386 = vld [vmem:[%s1 + $0x100] sm:$0xf]
        %v387 = vld [vmem:[%s1 + $0x104] sm:$0xf]
        %v388 = vld [vmem:[%s1 + $0x108] sm:$0xf]
        %v389 = vld [vmem:[%s1 + $0x10c] sm:$0xf]
        %v390 = vld [vmem:[%s1 + $0x110] sm:$0xf]
        %v391 = vld [vmem:[%s1 + $0x114] sm:$0xf]
        %v392 = vld [vmem:[%s1 + $0x118] sm:$0xf]
        %v393 = vld [vmem:[%s1 + $0x11c] sm:$0xf]
        %v394 = vld [vmem:[%s1 + $0x120] sm:$0xf]
        %v395 = vld [vmem:[%s1 + $0x124] sm:$0xf]
        %v396 = vld [vmem:[%s1 + $0x128] sm:$0xf]
        %v397 = vld [vmem:[%s1 + $0x12c] sm:$0xf]
        %v398 = vld [vmem:[%s1 + $0x130] sm:$0xf]
        %v399 = vld [vmem:[%s1 + $0x134] sm:$0xf]
        %v400 = vld [vmem:[%s1 + $0x138] sm:$0xf]
        %v401 = vld [vmem:[%s1 + $0x13c] sm:$0xf]
        %v402 = vld [vmem:[%s1 + $0x140] sm:$0xf]
        %v403 = vld [vmem:[%s1 + $0x144] sm:$0xf]
        %v404 = vld [vmem:[%s1 + $0x148] sm:$0xf]
        %v405 = vld [vmem:[%s1 + $0x14c] sm:$0xf]
        %v406 = vld [vmem:[%s1 + $0x150] sm:$0xf]
        %v407 = vld [vmem:[%s1 + $0x154] sm:$0xf]
        %v408 = vld [vmem:[%s1 + $0x158] sm:$0xf]
        %v409 = vld [vmem:[%s1 + $0x15c] sm:$0xf]
        %v410 = vld [vmem:[%s1 + $0x160] sm:$0xf]
        %v411 = vld [vmem:[%s1 + $0x164] sm:$0xf]
        %v412 = vld [vmem:[%s1 + $0x168] sm:$0xf]
        %v413 = vld [vmem:[%s1 + $0x16c] sm:$0xf]
        %v414 = vld [vmem:[%s1 + $0x170] sm:$0xf]
        %v415 = vld [vmem:[%s1 + $0x174] sm:$0xf]
        %v416 = vld [vmem:[%s1 + $0x178] sm:$0xf]
        %v417 = vld [vmem:[%s1 + $0x17c] sm:$0xf]
        %v418 = vld [vmem:[%s2] sm:$0x1]
        %v420 = vlaneseq
        %v421 = vshrl.u32 %v420, 7
        %v422 = vsub.s32 0, %v421
        %v423 = vrot.slane %v418, %v422
        %v473 = vunpack.c.l.b16 %v274
        %v474 = vunpack.c.h.b16 %v274
        %v475 = vunpack.c.l.b16 %v275
        %v476 = vunpack.c.h.b16 %v275
        %v477 = vunpack.c.l.b16 %v276
        %v478 = vunpack.c.h.b16 %v276
        %v479 = vunpack.c.l.b16 %v277
        %v480 = vunpack.c.h.b16 %v277
        %v481 = vunpack.c.l.b16 %v278
        %v482 = vunpack.c.h.b16 %v278
        %v483 = vunpack.c.l.b16 %v279
        %v484 = vunpack.c.h.b16 %v279
        %v485 = vunpack.c.l.b16 %v280
        %v486 = vunpack.c.h.b16 %v280
        %v487 = vunpack.c.l.b16 %v281
        %v488 = vunpack.c.h.b16 %v281
        %v489 = vunpack.c.l.b16 %v282
        %v490 = vunpack.c.h.b16 %v282
        %v491 = vunpack.c.l.b16 %v283
        %v492 = vunpack.c.h.b16 %v283
        %v493 = vunpack.c.l.b16 %v284
        %v494 = vunpack.c.h.b16 %v284
        %v495 = vunpack.c.l.b16 %v285
        %v496 = vunpack.c.h.b16 %v285
        %v497 = vunpack.c.l.b16 %v286
        %v498 = vunpack.c.h.b16 %v286
        %v499 = vunpack.c.l.b16 %v287
        %v500 = vunpack.c.h.b16 %v287
        %v501 = vunpack.c.l.b16 %v288
        %v502 = vunpack.c.h.b16 %v288
        %v503 = vunpack.c.l.b16 %v289
        %v504 = vunpack.c.h.b16 %v289
        %v505 = vunpack.c.l.b16 %v290
        %v506 = vunpack.c.h.b16 %v290
        %v507 = vunpack.c.l.b16 %v291
        %v508 = vunpack.c.h.b16 %v291
        %v509 = vunpack.c.l.b16 %v292
        %v510 = vunpack.c.h.b16 %v292
        %v511 = vunpack.c.l.b16 %v293
        %v512 = vunpack.c.h.b16 %v293
        %v513 = vunpack.c.l.b16 %v294
        %v514 = vunpack.c.h.b16 %v294
        %v515 = vunpack.c.l.b16 %v295
        %v516 = vunpack.c.h.b16 %v295
        %v517 = vunpack.c.l.b16 %v296
        %v518 = vunpack.c.h.b16 %v296
        %v519 = vunpack.c.l.b16 %v297
        %v520 = vunpack.c.h.b16 %v297
        %v521 = vunpack.c.l.b16 %v298
        %v522 = vunpack.c.h.b16 %v298
        %v523 = vunpack.c.l.b16 %v299
        %v524 = vunpack.c.h.b16 %v299
        %v525 = vunpack.c.l.b16 %v300
        %v526 = vunpack.c.h.b16 %v300
        %v527 = vunpack.c.l.b16 %v301
        %v528 = vunpack.c.h.b16 %v301
        %v529 = vunpack.c.l.b16 %v302
        %v530 = vunpack.c.h.b16 %v302
        %v531 = vunpack.c.l.b16 %v303
        %v532 = vunpack.c.h.b16 %v303
        %v533 = vunpack.c.l.b16 %v304
        %v534 = vunpack.c.h.b16 %v304
        %v535 = vunpack.c.l.b16 %v305
        %v536 = vunpack.c.h.b16 %v305
        %v537 = vunpack.c.l.b16 %v306
        %v538 = vunpack.c.h.b16 %v306
        %v539 = vunpack.c.l.b16 %v307
        %v540 = vunpack.c.h.b16 %v307
        %v541 = vunpack.c.l.b16 %v308
        %v542 = vunpack.c.h.b16 %v308
        %v543 = vunpack.c.l.b16 %v309
        %v544 = vunpack.c.h.b16 %v309
        %v545 = vunpack.c.l.b16 %v310
        %v546 = vunpack.c.h.b16 %v310
        %v547 = vunpack.c.l.b16 %v311
        %v548 = vunpack.c.h.b16 %v311
        %v549 = vunpack.c.l.b16 %v312
        %v550 = vunpack.c.h.b16 %v312
        %v551 = vunpack.c.l.b16 %v313
        %v552 = vunpack.c.h.b16 %v313
        %v553 = vunpack.c.l.b16 %v314
        %v554 = vunpack.c.h.b16 %v314
        %v555 = vunpack.c.l.b16 %v315
        %v556 = vunpack.c.h.b16 %v315
        %v557 = vunpack.c.l.b16 %v316
        %v558 = vunpack.c.h.b16 %v316
        %v559 = vunpack.c.l.b16 %v317
        %v560 = vunpack.c.h.b16 %v317
        %v561 = vunpack.c.l.b16 %v318
        %v562 = vunpack.c.h.b16 %v318
        %v563 = vunpack.c.l.b16 %v319
        %v564 = vunpack.c.h.b16 %v319
        %v565 = vunpack.c.l.b16 %v320
        %v566 = vunpack.c.h.b16 %v320
        %v567 = vunpack.c.l.b16 %v321
        %v568 = vunpack.c.h.b16 %v321
        %v569 = vpack.c.b16 %v479, %v473
        %v570 = vpack.c.b16 %v480, %v474
        %v571 = vpack.c.b16 %v481, %v475
        %v572 = vpack.c.b16 %v482, %v476
        %v573 = vpack.c.b16 %v483, %v477
        %v574 = vpack.c.b16 %v484, %v478
        %v575 = vpack.c.b16 %v491, %v485
        %v576 = vpack.c.b16 %v492, %v486
        %v577 = vpack.c.b16 %v493, %v487
        %v578 = vpack.c.b16 %v494, %v488
        %v579 = vpack.c.b16 %v495, %v489
        %v580 = vpack.c.b16 %v496, %v490
        %v581 = vpack.c.b16 %v503, %v497
        %v582 = vpack.c.b16 %v504, %v498
        %v583 = vpack.c.b16 %v505, %v499
        %v584 = vpack.c.b16 %v506, %v500
        %v585 = vpack.c.b16 %v507, %v501
        %v586 = vpack.c.b16 %v508, %v502
        %v587 = vpack.c.b16 %v515, %v509
        %v588 = vpack.c.b16 %v516, %v510
        %v589 = vpack.c.b16 %v517, %v511
        %v590 = vpack.c.b16 %v518, %v512
        %v591 = vpack.c.b16 %v519, %v513
        %v592 = vpack.c.b16 %v520, %v514
        %v593 = vpack.c.b16 %v527, %v521
        %v594 = vpack.c.b16 %v528, %v522
        %v595 = vpack.c.b16 %v529, %v523
        %v596 = vpack.c.b16 %v530, %v524
        %v597 = vpack.c.b16 %v531, %v525
        %v598 = vpack.c.b16 %v532, %v526
        %v599 = vpack.c.b16 %v539, %v533
        %v600 = vpack.c.b16 %v540, %v534
        %v601 = vpack.c.b16 %v541, %v535
        %v602 = vpack.c.b16 %v542, %v536
        %v603 = vpack.c.b16 %v543, %v537
        %v604 = vpack.c.b16 %v544, %v538
        %v605 = vpack.c.b16 %v551, %v545
        %v606 = vpack.c.b16 %v552, %v546
        %v607 = vpack.c.b16 %v553, %v547
        %v608 = vpack.c.b16 %v554, %v548
        %v609 = vpack.c.b16 %v555, %v549
        %v610 = vpack.c.b16 %v556, %v550
        %v611 = vpack.c.b16 %v563, %v557
        %v612 = vpack.c.b16 %v564, %v558
        %v613 = vpack.c.b16 %v565, %v559
        %v614 = vpack.c.b16 %v566, %v560
        %v615 = vpack.c.b16 %v567, %v561
        %v616 = vpack.c.b16 %v568, %v562
        %v761 = vunpack.c.l.b16 %v322
        %v762 = vunpack.c.l.b16 %v323
        %v763 = vunpack.c.l.b16 %v324
        %v764 = vunpack.c.l.b16 %v325
        %v765 = vunpack.c.l.b16 %v326
        %v766 = vunpack.c.l.b16 %v327
        %v767 = vunpack.c.l.b16 %v328
        %v768 = vunpack.c.l.b16 %v329
        %v769 = vunpack.c.l.b16 %v330
        %v770 = vunpack.c.l.b16 %v331
        %v771 = vunpack.c.l.b16 %v332
        %v772 = vunpack.c.l.b16 %v333
        %v773 = vunpack.c.l.b16 %v334
        %v774 = vunpack.c.l.b16 %v335
        %v775 = vunpack.c.l.b16 %v336
        %v776 = vunpack.c.l.b16 %v337
        %v777 = vunpack.c.l.b16 %v338
        %v778 = vunpack.c.l.b16 %v339
        %v779 = vunpack.c.l.b16 %v340
        %v780 = vunpack.c.l.b16 %v341
        %v781 = vunpack.c.l.b16 %v342
        %v782 = vunpack.c.l.b16 %v343
        %v783 = vunpack.c.l.b16 %v344
        %v784 = vunpack.c.l.b16 %v345
        %v785 = vunpack.c.l.b16 %v346
        %v786 = vunpack.c.l.b16 %v347
        %v787 = vunpack.c.l.b16 %v348
        %v788 = vunpack.c.l.b16 %v349
        %v789 = vunpack.c.l.b16 %v350
        %v790 = vunpack.c.l.b16 %v351
        %v791 = vunpack.c.l.b16 %v352
        %v792 = vunpack.c.l.b16 %v353
        %v793 = vunpack.c.l.b16 %v354
        %v794 = vunpack.c.l.b16 %v355
        %v795 = vunpack.c.l.b16 %v356
        %v796 = vunpack.c.l.b16 %v357
        %v797 = vunpack.c.l.b16 %v358
        %v798 = vunpack.c.l.b16 %v359
        %v799 = vunpack.c.l.b16 %v360
        %v800 = vunpack.c.l.b16 %v361
        %v801 = vunpack.c.l.b16 %v362
        %v802 = vunpack.c.l.b16 %v363
        %v803 = vunpack.c.l.b16 %v364
        %v804 = vunpack.c.l.b16 %v365
        %v805 = vunpack.c.l.b16 %v366
        %v806 = vunpack.c.l.b16 %v367
        %v807 = vunpack.c.l.b16 %v368
        %v808 = vunpack.c.l.b16 %v369
        %v809 = vunpack.c.l.b16 %v370
        %v810 = vunpack.c.l.b16 %v371
        %v811 = vunpack.c.l.b16 %v372
        %v812 = vunpack.c.l.b16 %v373
        %v813 = vunpack.c.l.b16 %v374
        %v814 = vunpack.c.l.b16 %v375
        %v815 = vunpack.c.l.b16 %v376
        %v816 = vunpack.c.l.b16 %v377
        %v817 = vunpack.c.l.b16 %v378
        %v818 = vunpack.c.l.b16 %v379
        %v819 = vunpack.c.l.b16 %v380
        %v820 = vunpack.c.l.b16 %v381
        %v821 = vunpack.c.l.b16 %v382
        %v822 = vunpack.c.l.b16 %v383
        %v823 = vunpack.c.l.b16 %v384
        %v824 = vunpack.c.l.b16 %v385
        %v825 = vunpack.c.l.b16 %v386
        %v826 = vunpack.c.l.b16 %v387
        %v827 = vunpack.c.l.b16 %v388
        %v828 = vunpack.c.l.b16 %v389
        %v829 = vunpack.c.l.b16 %v390
        %v830 = vunpack.c.l.b16 %v391
        %v831 = vunpack.c.l.b16 %v392
        %v832 = vunpack.c.l.b16 %v393
        %v833 = vunpack.c.l.b16 %v394
        %v834 = vunpack.c.l.b16 %v395
        %v835 = vunpack.c.l.b16 %v396
        %v836 = vunpack.c.l.b16 %v397
        %v837 = vunpack.c.l.b16 %v398
        %v838 = vunpack.c.l.b16 %v399
        %v839 = vunpack.c.l.b16 %v400
        %v840 = vunpack.c.l.b16 %v401
        %v841 = vunpack.c.l.b16 %v402
        %v842 = vunpack.c.l.b16 %v403
        %v843 = vunpack.c.l.b16 %v404
        %v844 = vunpack.c.l.b16 %v405
        %v845 = vunpack.c.l.b16 %v406
        %v846 = vunpack.c.l.b16 %v407
        %v847 = vunpack.c.l.b16 %v408
        %v848 = vunpack.c.l.b16 %v409
        %v849 = vunpack.c.l.b16 %v410
        %v850 = vunpack.c.l.b16 %v411
        %v851 = vunpack.c.l.b16 %v412
        %v852 = vunpack.c.l.b16 %v413
        %v853 = vunpack.c.l.b16 %v414
        %v854 = vunpack.c.l.b16 %v415
        %v855 = vunpack.c.l.b16 %v416
        %v856 = vunpack.c.l.b16 %v417
        %v857 = vpack.c.b16 %v762, %v761
        %v858 = vpack.c.b16 %v764, %v763
        %v859 = vpack.c.b16 %v766, %v765
        %v860 = vpack.c.b16 %v768, %v767
        %v861 = vpack.c.b16 %v770, %v769
        %v862 = vpack.c.b16 %v772, %v771
        %v863 = vpack.c.b16 %v774, %v773
        %v864 = vpack.c.b16 %v776, %v775
        %v865 = vpack.c.b16 %v778, %v777
        %v866 = vpack.c.b16 %v780, %v779
        %v867 = vpack.c.b16 %v782, %v781
        %v868 = vpack.c.b16 %v784, %v783
        %v869 = vpack.c.b16 %v786, %v785
        %v870 = vpack.c.b16 %v788, %v787
        %v871 = vpack.c.b16 %v790, %v789
        %v872 = vpack.c.b16 %v792, %v791
        %v873 = vpack.c.b16 %v794, %v793
        %v874 = vpack.c.b16 %v796, %v795
        %v875 = vpack.c.b16 %v798, %v797
        %v876 = vpack.c.b16 %v800, %v799
        %v877 = vpack.c.b16 %v802, %v801
        %v878 = vpack.c.b16 %v804, %v803
        %v879 = vpack.c.b16 %v806, %v805
        %v880 = vpack.c.b16 %v808, %v807
        %v881 = vpack.c.b16 %v810, %v809
        %v882 = vpack.c.b16 %v812, %v811
        %v883 = vpack.c.b16 %v814, %v813
        %v884 = vpack.c.b16 %v816, %v815
        %v885 = vpack.c.b16 %v818, %v817
        %v886 = vpack.c.b16 %v820, %v819
        %v887 = vpack.c.b16 %v822, %v821
        %v888 = vpack.c.b16 %v824, %v823
        %v889 = vpack.c.b16 %v826, %v825
        %v890 = vpack.c.b16 %v828, %v827
        %v891 = vpack.c.b16 %v830, %v829
        %v892 = vpack.c.b16 %v832, %v831
        %v893 = vpack.c.b16 %v834, %v833
        %v894 = vpack.c.b16 %v836, %v835
        %v895 = vpack.c.b16 %v838, %v837
        %v896 = vpack.c.b16 %v840, %v839
        %v897 = vpack.c.b16 %v842, %v841
        %v898 = vpack.c.b16 %v844, %v843
        %v899 = vpack.c.b16 %v846, %v845
        %v900 = vpack.c.b16 %v848, %v847
        %v901 = vpack.c.b16 %v850, %v849
        %v902 = vpack.c.b16 %v852, %v851
        %v903 = vpack.c.b16 %v854, %v853
        %v904 = vpack.c.b16 %v856, %v855
        %953 = vmatprep.subr.bf16.mxu0 0
        %954 = vmatpush1.bf16.msra.mxu0 %v864
        %955 = vmatprep.subr.bf16.mxu0 0
        %956 = vmatpush1.bf16.msra.mxu0 %v863
        %957 = vmatprep.subr.bf16.mxu0 0
        %958 = vmatpush1.bf16.msra.mxu0 %v862
        %959 = vmatprep.subr.bf16.mxu0 0
        %960 = vmatpush1.bf16.msra.mxu0 %v861
        %961 = vmatprep.subr.bf16.mxu0 0
        %962 = vmatpush1.bf16.msra.mxu0 %v860
        %963 = vmatprep.subr.bf16.mxu0 0
        %964 = vmatpush1.bf16.msra.mxu0 %v859
        %965 = vmatprep.subr.bf16.mxu0 0
        %966 = vmatpush1.bf16.msra.mxu0 %v858
        %967 = vmatprep.subr.bf16.mxu0 0
        %968 = vmatpush1.bf16.msra.mxu0 %v857
        %969 = vmatprep.subr.bf16.mxu0 0
        %970 = vmatpush2.bf16.msra.mxu0 %v872
        %971 = vmatprep.subr.bf16.mxu0 0
        %972 = vmatpush2.bf16.msra.mxu0 %v871
        %973 = vmatprep.subr.bf16.mxu0 0
        %974 = vmatpush2.bf16.msra.mxu0 %v870
        %975 = vmatprep.subr.bf16.mxu0 0
        %976 = vmatpush2.bf16.msra.mxu0 %v869
        %977 = vmatprep.subr.bf16.mxu0 0
        %978 = vmatpush2.bf16.msra.mxu0 %v868
        %979 = vmatprep.subr.bf16.mxu0 0
        %980 = vmatpush2.bf16.msra.mxu0 %v867
        %981 = vmatprep.subr.bf16.mxu0 0
        %982 = vmatpush2.bf16.msra.mxu0 %v866
        %983 = vmatprep.subr.bf16.mxu0 0
        %984 = vmatpush2.bf16.msra.mxu0 %v865
        %985 = vmatprep.mubr.bf16.mxu0 %v570
        %986 = vmatmul.mubr.bf16.gmra.mxu0 %v569
        %v987 = vpop.f32.mrf.mxu0
        %v988 = vadd.f32 %v423, %v987
        %v989 = vpop.f32.mrf.mxu0
        %v990 = vpop.f32.mrf.mxu0
        %v991 = vadd.f32 %v423, %v990
        %v992 = vpop.f32.mrf.mxu0
        %993 = vmatprep.mubr.bf16.mxu0 %v576
        %994 = vmatmul.mubr.bf16.gmra.mxu0 %v575
        %v995 = vpop.f32.mrf.mxu0
        %v996 = vadd.f32 %v423, %v995
        %v997 = vpop.f32.mrf.mxu0
        %v998 = vpop.f32.mrf.mxu0
        %v999 = vadd.f32 %v423, %v998
        %v1000 = vpop.f32.mrf.mxu0
        %1001 = vmatprep.mubr.bf16.mxu0 %v582
        %1002 = vmatmul.mubr.bf16.gmra.mxu0 %v581
        %v1003 = vpop.f32.mrf.mxu0
        %v1004 = vadd.f32 %v423, %v1003
        %v1005 = vpop.f32.mrf.mxu0
        %v1006 = vpop.f32.mrf.mxu0
        %v1007 = vadd.f32 %v423, %v1006
        %v1008 = vpop.f32.mrf.mxu0
        %1009 = vmatprep.mubr.bf16.mxu0 %v588
        %1010 = vmatmul.mubr.bf16.gmra.mxu0 %v587
        %v1011 = vpop.f32.mrf.mxu0
        %v1012 = vadd.f32 %v423, %v1011
        %v1013 = vpop.f32.mrf.mxu0
        %v1014 = vpop.f32.mrf.mxu0
        %v1015 = vadd.f32 %v423, %v1014
        %v1016 = vpop.f32.mrf.mxu0
        %1017 = vmatprep.mubr.bf16.mxu0 %v594
        %1018 = vmatmul.mubr.bf16.gmra.mxu0 %v593
        %v1019 = vpop.f32.mrf.mxu0
        %v1020 = vadd.f32 %v423, %v1019
        %v1021 = vpop.f32.mrf.mxu0
        %v1022 = vpop.f32.mrf.mxu0
        %v1023 = vadd.f32 %v423, %v1022
        %v1024 = vpop.f32.mrf.mxu0
        %1025 = vmatprep.mubr.bf16.mxu0 %v600
        %1026 = vmatmul.mubr.bf16.gmra.mxu0 %v599
        %v1027 = vpop.f32.mrf.mxu0
        %v1028 = vadd.f32 %v423, %v1027
        %v1029 = vpop.f32.mrf.mxu0
        %v1030 = vpop.f32.mrf.mxu0
        %v1031 = vadd.f32 %v423, %v1030
        %v1032 = vpop.f32.mrf.mxu0
        %1033 = vmatprep.mubr.bf16.mxu0 %v606
        %1034 = vmatmul.mubr.bf16.gmra.mxu0 %v605
        %v1035 = vpop.f32.mrf.mxu0
        %v1036 = vadd.f32 %v423, %v1035
        %v1037 = vpop.f32.mrf.mxu0
        %v1038 = vpop.f32.mrf.mxu0
        %v1039 = vadd.f32 %v423, %v1038
        %v1040 = vpop.f32.mrf.mxu0
        %1041 = vmatprep.mubr.bf16.mxu0 %v612
        %1042 = vmatmul.mubr.bf16.gmra.mxu0 %v611
        %v1043 = vpop.f32.mrf.mxu0
        %v1044 = vadd.f32 %v423, %v1043
        %v1045 = vpop.f32.mrf.mxu0
        %v1046 = vpop.f32.mrf.mxu0
        %v1047 = vadd.f32 %v423, %v1046
        %v1048 = vpop.f32.mrf.mxu0
        %1049 = vdwg.mxu0
        %1050 = vmatprep.subr.bf16.mxu0 0
        %1051 = vmatpush1.bf16.msra.mxu0 %v880
        %1052 = vmatprep.subr.bf16.mxu0 0
        %1053 = vmatpush1.bf16.msra.mxu0 %v879
        %1054 = vmatprep.subr.bf16.mxu0 0
        %1055 = vmatpush1.bf16.msra.mxu0 %v878
        %1056 = vmatprep.subr.bf16.mxu0 0
        %1057 = vmatpush1.bf16.msra.mxu0 %v877
        %1058 = vmatprep.subr.bf16.mxu0 0
        %1059 = vmatpush1.bf16.msra.mxu0 %v876
        %1060 = vmatprep.subr.bf16.mxu0 0
        %1061 = vmatpush1.bf16.msra.mxu0 %v875
        %1062 = vmatprep.subr.bf16.mxu0 0
        %1063 = vmatpush1.bf16.msra.mxu0 %v874
        %1064 = vmatprep.subr.bf16.mxu0 0
        %1065 = vmatpush1.bf16.msra.mxu0 %v873
        %1066 = vmatprep.subr.bf16.mxu0 0
        %1067 = vmatpush2.bf16.msra.mxu0 %v888
        %1068 = vmatprep.subr.bf16.mxu0 0
        %1069 = vmatpush2.bf16.msra.mxu0 %v887
        %1070 = vmatprep.subr.bf16.mxu0 0
        %1071 = vmatpush2.bf16.msra.mxu0 %v886
        %1072 = vmatprep.subr.bf16.mxu0 0
        %1073 = vmatpush2.bf16.msra.mxu0 %v885
        %1074 = vmatprep.subr.bf16.mxu0 0
        %1075 = vmatpush2.bf16.msra.mxu0 %v884
        %1076 = vmatprep.subr.bf16.mxu0 0
        %1077 = vmatpush2.bf16.msra.mxu0 %v883
        %1078 = vmatprep.subr.bf16.mxu0 0
        %1079 = vmatpush2.bf16.msra.mxu0 %v882
        %1080 = vmatprep.subr.bf16.mxu0 0
        %1081 = vmatpush2.bf16.msra.mxu0 %v881
        %1082 = vmatprep.mubr.bf16.mxu0 %v572
        %1083 = vmatmul.mubr.bf16.gmra.mxu0 %v571
        %v1084 = vpop.f32.mrf.mxu0
        %v1085 = vadd.f32 %v988, %v1084
        %v1086 = vpop.f32.mrf.mxu0
        %v1087 = vpop.f32.mrf.mxu0
        %v1088 = vadd.f32 %v991, %v1087
        %v1089 = vpop.f32.mrf.mxu0
        %1090 = vmatprep.mubr.bf16.mxu0 %v578
        %1091 = vmatmul.mubr.bf16.gmra.mxu0 %v577
        %v1092 = vpop.f32.mrf.mxu0
        %v1093 = vadd.f32 %v996, %v1092
        %v1094 = vpop.f32.mrf.mxu0
        %v1095 = vpop.f32.mrf.mxu0
        %v1096 = vadd.f32 %v999, %v1095
        %v1097 = vpop.f32.mrf.mxu0
        %1098 = vmatprep.mubr.bf16.mxu0 %v584
        %1099 = vmatmul.mubr.bf16.gmra.mxu0 %v583
        %v1100 = vpop.f32.mrf.mxu0
        %v1101 = vadd.f32 %v1004, %v1100
        %v1102 = vpop.f32.mrf.mxu0
        %v1103 = vpop.f32.mrf.mxu0
        %v1104 = vadd.f32 %v1007, %v1103
        %v1105 = vpop.f32.mrf.mxu0
        %1106 = vmatprep.mubr.bf16.mxu0 %v590
        %1107 = vmatmul.mubr.bf16.gmra.mxu0 %v589
        %v1108 = vpop.f32.mrf.mxu0
        %v1109 = vadd.f32 %v1012, %v1108
        %v1110 = vpop.f32.mrf.mxu0
        %v1111 = vpop.f32.mrf.mxu0
        %v1112 = vadd.f32 %v1015, %v1111
        %v1113 = vpop.f32.mrf.mxu0
        %1114 = vmatprep.mubr.bf16.mxu0 %v596
        %1115 = vmatmul.mubr.bf16.gmra.mxu0 %v595
        %v1116 = vpop.f32.mrf.mxu0
        %v1117 = vadd.f32 %v1020, %v1116
        %v1118 = vpop.f32.mrf.mxu0
        %v1119 = vpop.f32.mrf.mxu0
        %v1120 = vadd.f32 %v1023, %v1119
        %v1121 = vpop.f32.mrf.mxu0
        %1122 = vmatprep.mubr.bf16.mxu0 %v602
        %1123 = vmatmul.mubr.bf16.gmra.mxu0 %v601
        %v1124 = vpop.f32.mrf.mxu0
        %v1125 = vadd.f32 %v1028, %v1124
        %v1126 = vpop.f32.mrf.mxu0
        %v1127 = vpop.f32.mrf.mxu0
        %v1128 = vadd.f32 %v1031, %v1127
        %v1129 = vpop.f32.mrf.mxu0
        %1130 = vmatprep.mubr.bf16.mxu0 %v608
        %1131 = vmatmul.mubr.bf16.gmra.mxu0 %v607
        %v1132 = vpop.f32.mrf.mxu0
        %v1133 = vadd.f32 %v1036, %v1132
        %v1134 = vpop.f32.mrf.mxu0
        %v1135 = vpop.f32.mrf.mxu0
        %v1136 = vadd.f32 %v1039, %v1135
        %v1137 = vpop.f32.mrf.mxu0
        %1138 = vmatprep.mubr.bf16.mxu0 %v614
        %1139 = vmatmul.mubr.bf16.gmra.mxu0 %v613
        %v1140 = vpop.f32.mrf.mxu0
        %v1141 = vadd.f32 %v1044, %v1140
        %v1142 = vpop.f32.mrf.mxu0
        %v1143 = vpop.f32.mrf.mxu0
        %v1144 = vadd.f32 %v1047, %v1143
        %v1145 = vpop.f32.mrf.mxu0
        %1146 = vdwg.mxu0
        %1147 = vmatprep.subr.bf16.mxu0 0
        %1148 = vmatpush1.bf16.msra.mxu0 %v896
        %1149 = vmatprep.subr.bf16.mxu0 0
        %1150 = vmatpush1.bf16.msra.mxu0 %v895
        %1151 = vmatprep.subr.bf16.mxu0 0
        %1152 = vmatpush1.bf16.msra.mxu0 %v894
        %1153 = vmatprep.subr.bf16.mxu0 0
        %1154 = vmatpush1.bf16.msra.mxu0 %v893
        %1155 = vmatprep.subr.bf16.mxu0 0
        %1156 = vmatpush1.bf16.msra.mxu0 %v892
        %1157 = vmatprep.subr.bf16.mxu0 0
        %1158 = vmatpush1.bf16.msra.mxu0 %v891
        %1159 = vmatprep.subr.bf16.mxu0 0
        %1160 = vmatpush1.bf16.msra.mxu0 %v890
        %1161 = vmatprep.subr.bf16.mxu0 0
        %1162 = vmatpush1.bf16.msra.mxu0 %v889
        %1163 = vmatprep.subr.bf16.mxu0 0
        %1164 = vmatpush2.bf16.msra.mxu0 %v904
        %1165 = vmatprep.subr.bf16.mxu0 0
        %1166 = vmatpush2.bf16.msra.mxu0 %v903
        %1167 = vmatprep.subr.bf16.mxu0 0
        %1168 = vmatpush2.bf16.msra.mxu0 %v902
        %1169 = vmatprep.subr.bf16.mxu0 0
        %1170 = vmatpush2.bf16.msra.mxu0 %v901
        %1171 = vmatprep.subr.bf16.mxu0 0
        %1172 = vmatpush2.bf16.msra.mxu0 %v900
        %1173 = vmatprep.subr.bf16.mxu0 0
        %1174 = vmatpush2.bf16.msra.mxu0 %v899
        %1175 = vmatprep.subr.bf16.mxu0 0
        %1176 = vmatpush2.bf16.msra.mxu0 %v898
        %1177 = vmatprep.subr.bf16.mxu0 0
        %1178 = vmatpush2.bf16.msra.mxu0 %v897
        %1179 = vmatprep.mubr.bf16.mxu0 %v574
        %1180 = vmatmul.mubr.bf16.gmra.mxu0 %v573
        %v1181 = vpop.f32.mrf.mxu0
        %v1182 = vadd.f32 %v1085, %v1181
        %v1183 = vpop.f32.mrf.mxu0
        %v1184 = vpop.f32.mrf.mxu0
        %v1185 = vadd.f32 %v1088, %v1184
        %v1186 = vpop.f32.mrf.mxu0
        %1187 = vmatprep.mubr.bf16.mxu0 %v580
        %1188 = vmatmul.mubr.bf16.gmra.mxu0 %v579
        %v1189 = vpop.f32.mrf.mxu0
        %v1190 = vadd.f32 %v1093, %v1189
        %v1191 = vpop.f32.mrf.mxu0
        %v1192 = vpop.f32.mrf.mxu0
        %v1193 = vadd.f32 %v1096, %v1192
        %v1194 = vpop.f32.mrf.mxu0
        %1195 = vmatprep.mubr.bf16.mxu0 %v586
        %1196 = vmatmul.mubr.bf16.gmra.mxu0 %v585
        %v1197 = vpop.f32.mrf.mxu0
        %v1198 = vadd.f32 %v1101, %v1197
        %v1199 = vpop.f32.mrf.mxu0
        %v1200 = vpop.f32.mrf.mxu0
        %v1201 = vadd.f32 %v1104, %v1200
        %v1202 = vpop.f32.mrf.mxu0
        %1203 = vmatprep.mubr.bf16.mxu0 %v592
        %1204 = vmatmul.mubr.bf16.gmra.mxu0 %v591
        %v1205 = vpop.f32.mrf.mxu0
        %v1206 = vadd.f32 %v1109, %v1205
        %v1207 = vpop.f32.mrf.mxu0
        %v1208 = vpop.f32.mrf.mxu0
        %v1209 = vadd.f32 %v1112, %v1208
        %v1210 = vpop.f32.mrf.mxu0
        %1211 = vmatprep.mubr.bf16.mxu0 %v598
        %1212 = vmatmul.mubr.bf16.gmra.mxu0 %v597
        %v1213 = vpop.f32.mrf.mxu0
        %v1214 = vadd.f32 %v1117, %v1213
        %v1215 = vpop.f32.mrf.mxu0
        %v1216 = vpop.f32.mrf.mxu0
        %v1217 = vadd.f32 %v1120, %v1216
        %v1218 = vpop.f32.mrf.mxu0
        %1219 = vmatprep.mubr.bf16.mxu0 %v604
        %1220 = vmatmul.mubr.bf16.gmra.mxu0 %v603
        %v1221 = vpop.f32.mrf.mxu0
        %v1222 = vadd.f32 %v1125, %v1221
        %v1223 = vpop.f32.mrf.mxu0
        %v1224 = vpop.f32.mrf.mxu0
        %v1225 = vadd.f32 %v1128, %v1224
        %v1226 = vpop.f32.mrf.mxu0
        %1227 = vmatprep.mubr.bf16.mxu0 %v610
        %1228 = vmatmul.mubr.bf16.gmra.mxu0 %v609
        %v1229 = vpop.f32.mrf.mxu0
        %v1230 = vadd.f32 %v1133, %v1229
        %v1231 = vpop.f32.mrf.mxu0
        %v1232 = vpop.f32.mrf.mxu0
        %v1233 = vadd.f32 %v1136, %v1232
        %v1234 = vpop.f32.mrf.mxu0
        %1235 = vmatprep.mubr.bf16.mxu0 %v616
        %1236 = vmatmul.mubr.bf16.gmra.mxu0 %v615
        %v1237 = vpop.f32.mrf.mxu0
        %v1238 = vadd.f32 %v1141, %v1237
        %v1239 = vpop.f32.mrf.mxu0
        %v1240 = vpop.f32.mrf.mxu0
        %v1241 = vadd.f32 %v1144, %v1240
        %v1242 = vpop.f32.mrf.mxu0
        %1243 = vdwg.mxu0
        %1244 = vxpose.xlu0.b32.start [1/16] %v1182, 128
        %1245 = vxpose.xlu0.b32.cont [2/16] %v1185, 128
        %1246 = vxpose.xlu0.b32.cont [3/16] %v1190, 128
        %1247 = vxpose.xlu0.b32.cont [4/16] %v1193, 128
        %1248 = vxpose.xlu0.b32.cont [5/16] %v1198, 128
        %1249 = vxpose.xlu0.b32.cont [6/16] %v1201, 128
        %1250 = vxpose.xlu0.b32.cont [7/16] %v1206, 128
        %1251 = vxpose.xlu0.b32.cont [8/16] %v1209, 128
        %1252 = vxpose.xlu0.b32.cont [9/16] %v1214, 128
        %1253 = vxpose.xlu0.b32.cont [10/16] %v1217, 128
        %1254 = vxpose.xlu0.b32.cont [11/16] %v1222, 128
        %1255 = vxpose.xlu0.b32.cont [12/16] %v1225, 128
        %1256 = vxpose.xlu0.b32.cont [13/16] %v1230, 128
        %1257 = vxpose.xlu0.b32.cont [14/16] %v1233, 128
        %1258 = vxpose.xlu0.b32.cont [15/16] %v1238, 128
        %1259 = vxpose.xlu0.b32.end [16/16] %v1241, 128
        %v1260 = vpop.trf.xlu0
        %v1261 = vpop.trf.xlu0
        %v1262 = vpop.trf.xlu0
        %v1263 = vpop.trf.xlu0
        %v1264 = vpop.trf.xlu0
        %v1265 = vpop.trf.xlu0
        %v1266 = vpop.trf.xlu0
        %v1267 = vpop.trf.xlu0
        %v1268 = vpop.trf.xlu0
        %v1269 = vpop.trf.xlu0
        %v1270 = vpop.trf.xlu0
        %v1271 = vpop.trf.xlu0
        %v1272 = vpop.trf.xlu0
        %v1273 = vpop.trf.xlu0
        %v1274 = vpop.trf.xlu0
        %v1275 = vpop.trf.xlu0
        %v1276 = vld [vmem:[%s272] sm:$0xf]
        %v1277 = vadd.f32 %v1276, 1.0
        %v1278 = vmul.f32 %v1260, %v1277
        %vm1279 = vcmp.ge.f32.partialorder %v1276, 0.0
        %v1280 = vsel %vm1279, 1, 0
        %v1281 = vcvt.s32.f32 %v1280
        %v1282 = vsub.f32 0.0, %v1278
        %v1283 = vmax.f32 %v1282, 0.0
        %vm1284 = vcmp.ne.f32.partialorder %v1282, %v1282
        %v1285 = vadd.f32 %v1282, 0.0
        %v1286 = vand.u32 2147483647, %v1282
        %v1287 = vsub.f32 0.0, %v1286
        %v1288 = vmul.f32 %v1287, 1.442695
        %v1289 = vpow.pop %v1288
        %v1290 = vadd.f32 %v1289, 1.0
        %v1291 = vlog2.pop %v1290
        %v1292 = vmul.f32 %v1291, 0.6931472
        %v1293 = vmul.f32 -0.5, %v1289
        %v1294 = vadd.f32 %v1293, 1.0
        %v1295 = vmul.f32 %v1294, %v1289
        %v1296 = vand.u32 2147483647, %v1289
        %vm1297 = vcmp.lt.f32.partialorder %v1296, 0.0004427343
        %v1298 = vsel %vm1297, %v1295, %v1292
        %v1299 = vadd.f32 %v1283, %v1298
        %v1300 = vsel %vm1284, %v1285, %v1299
        %v1301 = vmax.f32 %v1278, 0.0
        %vm1302 = vcmp.ne.f32.partialorder %v1278, %v1278
        %v1303 = vadd.f32 %v1278, 0.0
        %v1304 = vand.u32 2147483647, %v1278
        %v1305 = vsub.f32 0.0, %v1304
        %v1306 = vmul.f32 %v1305, 1.442695
        %v1307 = vpow.pop %v1306
        %v1308 = vadd.f32 %v1307, 1.0
        %v1309 = vlog2.pop %v1308
        %v1310 = vmul.f32 %v1309, 0.6931472
        %v1311 = vmul.f32 -0.5, %v1307
        %v1312 = vadd.f32 %v1311, 1.0
        %v1313 = vmul.f32 %v1312, %v1307
        %v1314 = vand.u32 2147483647, %v1307
        %vm1315 = vcmp.lt.f32.partialorder %v1314, 0.0004427343
        %v1316 = vsel %vm1315, %v1313, %v1310
        %v1317 = vadd.f32 %v1301, %v1316
        %v1318 = vsel %vm1302, %v1303, %v1317
        %v1320 = vrot.slane %v1300, 6
        %v1322 = vmul.f32 %v1276, %v1320
        %v1323 = vsub.f32 1.0, %v1276
        %v1325 = vrot.slane %v1318, 6
        %v1327 = vmul.f32 %v1323, %v1325
        %v1328 = vadd.f32 %v1322, %v1327
        %v1329 = vlaneseq
        %v1330 = vshrl.u32 %v1329, 7
        %v1331 = vsub.s32 2, %v1330
        %v1332 = vrot.slane %v1281, %v1331
        %v1333 = vmul.f32 %v1332, %v1328
        %v1334 = vxor.u32 %v1278, 2147483648
        %v1335 = vmul.f32 %v1334, 1.442695
        %v1336 = vpow.pop %v1335
        %v1337 = vadd.f32 %v1336, 1.0
        %v1338 = vrcp.pop %v1337
        %v1339 = vmul.f32 1.0, %v1338
        %v1340 = vmul.f32 %v1339, %v1332
        %1341 = vst [vmem:[%s260] sm:$0x3] %v1340
        %vm1342 = vcmask 1043458
        %v1343 = vsel %vm1342, %v1333, 0.0
        %1344 = vadd.xlane.f32.xlu0 %v1343
        %v1345 = vpop.xlane.xlu0 %1344
        %v1346 = vlaneseq
        %v1347 = vand.u32 %v1346, 127
        %vm1348 = vcmp.eq.s32.totalorder %v1347, 0
        %v1349 = vsel %vm1348, %v1345, 0.0
        %1350 = vst [vmem:[%s267 - $0x2] sm:$0xc] %v1349
        %s1351 = sand.u32 %s128, 1
        %s1352 = scalar_lea.sflag [#allocation4], %s1351
        %s1353 = sand.u32 %s128, 1
        %s1354 = smul.addr %s1353, 2
        %s1355 = scalar_lea.vmem [#allocation5], %s1354
        %s1356 = sand.u32 %s154, 1
        %s1357 = scalar_lea.sflag [#allocation7], %s1356
        %s1358 = sand.u32 %s154, 1
        %s1359 = smul.addr %s1358, 2
        %s1360 = scalar_lea.vmem [#allocation6], %s1359
        // Predicated region
        $region41: #{tpu_custom_call.1} parent=35 // pred_check
          %p1361 = pneg %p138
        $region42: #{tpu_custom_call.1} parent=35 // pred_check_branch
          %1363 = sbr.rel (%p1361) target = $region44
        $region43: #{tpu_custom_call.1} parent=35 // pred_region
          %s1365 = ssub.s32 32, 32
          %1366 = vsyncadd %s1352, %s1365
          %s1367 = smul.addr %s26, 32
          %s1368 = scalar_lea.hbm %s4, %s1367
          %s1370 = sshll.u32 %s1355, 4
          %s1371 = int_to_ptr.vmem [resolvable:$true] %s1370
          %1373 = dma.vmem_to_hbm [thread:$0]  %s1371, 32, %s1368, %s1352
        $region44: #{tpu_custom_call.1} parent=35 // pred_fallthru
          _
        // Predicated region
        $region45: #{tpu_custom_call.1} parent=35 // pred_check
          %p1374 = pneg %p164
        $region46: #{tpu_custom_call.1} parent=35 // pred_check_branch
          %1376 = sbr.rel (%p1374) target = $region48
        $region47: #{tpu_custom_call.1} parent=35 // pred_region
          %s1378 = ssub.s32 32, 32
          %1379 = vsyncadd %s1357, %s1378
          %s1380 = smul.addr %s26, 32
          %s1381 = scalar_lea.hbm %s5, %s1380
          %s1383 = sshll.u32 %s1360, 4
          %s1384 = int_to_ptr.vmem [resolvable:$true] %s1383
          %1386 = dma.vmem_to_hbm [thread:$0]  %s1384, 32, %s1381, %s1357
        $region48: #{tpu_custom_call.1} parent=35 // pred_fallthru
          _
      $region36: #{tpu_custom_call.1} parent=5 // pred_fallthru
        _
      %p1387 = scmp.le.s32.totalorder 2, %s21
      // Predicated region
      $region49: #{tpu_custom_call.1} parent=5 // pred_check
        %p1388 = pneg %p1387
      $region50: #{tpu_custom_call.1} parent=5 // pred_check_branch
        %1390 = sbr.rel (%p1388) target = $region52
      $region51: #{tpu_custom_call.1} parent=5 // pred_region
        %s1391 = ssub.s32 %s21, 2
        // Predicated region
        $region53: #{tpu_custom_call.1} parent=51 // pred_check
          %p1392 = pneg %p144
        $region54: #{tpu_custom_call.1} parent=51 // pred_check_branch
          %1394 = sbr.rel (%p1392) target = $region56
        $region55: #{tpu_custom_call.1} parent=51 // pred_region
          %s1395 = sand.u32 %s129, 1
          %s1396 = scalar_lea.sflag [#allocation4], %s1395
          %s1397 = sand.u32 %s129, 1
          %s1398 = smul.addr %s1397, 2
          %s1399 = scalar_lea.vmem [#allocation5], %s1398
          %1400 = dma.done %s1396, 32
        $region56: #{tpu_custom_call.1} parent=51 // pred_fallthru
          _
        // Predicated region
        $region57: #{tpu_custom_call.1} parent=51 // pred_check
          %p1401 = pneg %p170
        $region58: #{tpu_custom_call.1} parent=51 // pred_check_branch
          %1403 = sbr.rel (%p1401) target = $region60
        $region59: #{tpu_custom_call.1} parent=51 // pred_region
          %s1404 = sand.u32 %s155, 1
          %s1405 = scalar_lea.sflag [#allocation7], %s1404
          %s1406 = sand.u32 %s155, 1
          %s1407 = smul.addr %s1406, 2
          %s1408 = scalar_lea.vmem [#allocation6], %s1407
          %1409 = dma.done %s1405, 32
        $region60: #{tpu_custom_call.1} parent=51 // pred_fallthru
          _
      $region52: #{tpu_custom_call.1} parent=5 // pred_fallthru
        _
    $region6: #{tpu_custom_call.1} parent=1 // loop_footer
      %s25 = sadd.s32 1, %s21
    $region7: #{tpu_custom_call.1} parent=1 // loop_footer_branch
      %20 = sbr.rel target = $region3
    $region8: #{tpu_custom_call.1} parent=1 // loop_exit
      _
    %1410 = vsyncpa [#allocation3], 1
    %s1411 = scalar_lea.sflag [#allocation3], 1
    %1412 = vsyncpa %s1411, 1
    %1413 = vsyncpa [#allocation4], 1
    %s1414 = scalar_lea.sflag [#allocation4], 1
    %1415 = vsyncpa %s1414, 1
    %1416 = vsyncpa [#allocation7], 1
    %s1417 = scalar_lea.sflag [#allocation7], 1
    %1418 = vsyncpa %s1417, 1

</llo_original>
